<compile_context>
chip_gen: v5e
topology: v5e:2x2
jax: 0.10.0
libtpu: 0.0.40
codegen_flags: <defaults>
</compile_context>

<pallas_src>
import jax
import jax.numpy as jnp
from jax.experimental import pallas as pl
from jax.experimental.pallas import tpu as pltpu


def _round_up(x, m):
    return ((x + m - 1) // m) * m


def _linear_relu_kernel(a_ref, w_ref, b_ref, o_ref):
    # a_ref: (TM, Kp) bf16, w_ref: (Kp, Np) bf16, b_ref: (1, Np) f32
    acc = jnp.dot(a_ref[...], w_ref[...], preferred_element_type=jnp.float32)
    acc = acc + b_ref[...]                                   # bias broadcast over rows
    o_ref[...] = jnp.maximum(acc, 0.0).astype(o_ref.dtype)   # ReLU


def linear_block_forward(x, weight, bias, *, tm=512):
    """LinearBlock forward (norm='none', activation='relu').

    x:      [B, IN]   float32
    weight: [OUT, IN] float32  (PyTorch nn.Linear weight layout)
    bias:   [OUT]     float32
    returns [B, OUT]  float32
    """
    B, IN = x.shape
    OUT, _ = weight.shape

    # Lane-dense padding of contraction (K) and output (N) dims.
    k_pad = _round_up(IN, 128)
    n_pad = _round_up(OUT, 128)

    # Row tile: for small problems collapse the grid to a single step;
    # for big B tile rows at tm (sweepable) with a parallel grid axis.
    tm_eff = min(tm, _round_up(B, 8))
    m_pad = _round_up(B, tm_eff)

    # Single pad per operand; bf16 inputs/weights, f32 accumulate on MXU.
    a = jnp.pad(x, ((0, m_pad - B), (0, k_pad - IN))).astype(jnp.bfloat16)
    w2 = jnp.pad(weight.T, ((0, k_pad - IN), (0, n_pad - OUT))).astype(jnp.bfloat16)
    b2 = jnp.pad(bias, (0, n_pad - OUT)).reshape(1, n_pad).astype(jnp.float32)

    out = pl.pallas_call(
        _linear_relu_kernel,
        out_shape=jax.ShapeDtypeStruct((m_pad, n_pad), jnp.float32),
        grid_spec=pltpu.PrefetchScalarGridSpec(
            num_scalar_prefetch=0,
            grid=(m_pad // tm_eff,),
            in_specs=[
                pl.BlockSpec((tm_eff, k_pad), lambda i: (i, 0)),   # activation tile
                pl.BlockSpec((k_pad, n_pad), lambda i: (0, 0)),    # weight, resident
                pl.BlockSpec((1, n_pad), lambda i: (0, 0)),        # bias, resident
            ],
            out_specs=pl.BlockSpec((tm_eff, n_pad), lambda i: (i, 0)),
        ),
        compiler_params=pltpu.CompilerParams(
            dimension_semantics=("parallel",)),
    )(a, w2, b2)

    # Slice off the row / output-lane padding.
    return out[:B, :OUT]


if __name__ == "__main__":
    # LinearBlock(input_dim=32, output_dim=32, norm='none', activation='relu')
    B, IN, OUT = 8, 32, 32

    key = jax.random.PRNGKey(0)
    kx, kw, kb = jax.random.split(key, 3)
    x = jax.random.normal(kx, (B, IN), dtype=jnp.float32)
    bound = 1.0 / float(jnp.sqrt(jnp.float32(IN)))
    weight = jax.random.uniform(kw, (OUT, IN), jnp.float32, -bound, bound)
    bias = jax.random.uniform(kb, (OUT,), jnp.float32, -bound, bound)

    y = linear_block_forward(x, weight, bias)
    y = jax.block_until_ready(y)

    # Reference in matching precision (bf16 inputs, f32 accumulate).
    ref_bf16 = jnp.maximum(
        jnp.dot(x.astype(jnp.bfloat16), weight.T.astype(jnp.bfloat16),
                preferred_element_type=jnp.float32) + bias[None, :], 0.0)
    # Full-f32 reference for a looser sanity check.
    ref_f32 = jnp.maximum(x @ weight.T + bias[None, :], 0.0)

    assert y.shape == (B, OUT)
    assert jnp.allclose(y, ref_bf16, atol=1e-3, rtol=1e-3)
    assert jnp.allclose(y, ref_f32, atol=5e-2, rtol=5e-2)

    # TODO(synk): norm='bn'/'in'/'ln'/'sn' branches and non-ReLU activations of
    # LinearBlock are not used by the default config and are not implemented here.
    print("KERNEL_OK")
</pallas_src>

<mosaic_0001>
module attributes {stable_mosaic.version = 11 : i64} {
  func.func @_linear_relu_kernel(%arg0: i32, %arg1: memref<8x128xbf16, #tpu.memory_space<vmem>>, %arg2: memref<128x128xbf16, #tpu.memory_space<vmem>>, %arg3: memref<1x128xf32, #tpu.memory_space<vmem>>, %arg4: memref<8x128xf32, #tpu.memory_space<vmem>>) attributes {dimension_semantics = [#tpu.dimension_semantics<parallel>], iteration_bounds = array<i64: 1>, scalar_prefetch = 0 : i64, scratch_operands = 0 : i64, tpu.core_type = #tpu.core_type<tc>, window_params = [{transform_indices = @transform_0, window_bounds = array<i64: 8, 128>}, {pipeline_mode = #tpu.pipeline_mode<synchronous>, transform_indices = @transform_1, window_bounds = array<i64: 128, 128>}, {pipeline_mode = #tpu.pipeline_mode<synchronous>, transform_indices = @transform_2, window_bounds = array<i64: 1, 128>}, {transform_indices = @transform_3, window_bounds = array<i64: 8, 128>}]} {
    %c0 = arith.constant 0 : index
    %c0_0 = arith.constant 0 : index
    %0 = vector.load %arg1[%c0, %c0_0] : memref<8x128xbf16, #tpu.memory_space<vmem>>, vector<8x128xbf16>
    %c0_1 = arith.constant 0 : index
    %c0_2 = arith.constant 0 : index
    %1 = vector.load %arg2[%c0_1, %c0_2] : memref<128x128xbf16, #tpu.memory_space<vmem>>, vector<128x128xbf16>
    %cst = arith.constant dense<0.000000e+00> : vector<8x128xf32>
    %2 = tpu.matmul %0, %1, %cst {dimension_numbers = #tpu.dot_dimension_numbers<[1], [0], [0], [1], [0, 0, 1, 1], [], []>} : vector<8x128xbf16>, vector<128x128xbf16>, vector<8x128xf32> -> vector<8x128xf32>
    %c0_3 = arith.constant 0 : index
    %c0_4 = arith.constant 0 : index
    %3 = vector.load %arg3[%c0_3, %c0_4] : memref<1x128xf32, #tpu.memory_space<vmem>>, vector<1x128xf32>
    %4 = vector.broadcast %3 : vector<1x128xf32> to vector<8x128xf32>
    %5 = arith.addf %2, %4 : vector<8x128xf32>
    %cst_5 = arith.constant 0.000000e+00 : f32
    %6 = vector.broadcast %cst_5 : f32 to vector<8x128xf32>
    %7 = arith.maximumf %5, %6 : vector<8x128xf32>
    %c0_6 = arith.constant 0 : index
    %c0_7 = arith.constant 0 : index
    %8 = vector.load %arg4[%c0_6, %c0_7] : memref<8x128xf32, #tpu.memory_space<vmem>>, vector<8x128xf32>
    tpu.vector_store %arg4[%c0_6, %c0_7], %7 {strides = array<i32>} : memref<8x128xf32, #tpu.memory_space<vmem>>, vector<8x128xf32>,
    return
  }
  func.func @transform_0(%arg0: i32) -> (i32, i32) {
    %c0_i32 = arith.constant 0 : i32
    %c0_i32_0 = arith.constant 0 : i32
    return %arg0, %c0_i32 : i32, i32
  }
  func.func @transform_1(%arg0: i32) -> (i32, i32) {
    %c0_i32 = arith.constant 0 : i32
    %c0_i32_0 = arith.constant 0 : i32
    %c0_i32_1 = arith.constant 0 : i32
    return %c0_i32, %c0_i32_0 : i32, i32
  }
  func.func @transform_2(%arg0: i32) -> (i32, i32) {
    %c0_i32 = arith.constant 0 : i32
    %c0_i32_0 = arith.constant 0 : i32
    %c0_i32_1 = arith.constant 0 : i32
    return %c0_i32, %c0_i32_0 : i32, i32
  }
  func.func @transform_3(%arg0: i32) -> (i32, i32) {
    %c0_i32 = arith.constant 0 : i32
    %c0_i32_0 = arith.constant 0 : i32
    return %arg0, %c0_i32 : i32, i32
  }
}

</mosaic_0001>

<llo_original>
// kernel: tpu_custom_call.1
$region0: #{tpu_custom_call.1}
  #allocation0 [shape = 'u32[]', space=smem, size = 0x4, offset = 0x4, fixed_abs, tag = 'smem constant byte address 0x4 - core index']
  #allocation1 [shape = 'u32[72,128]{1,0:T(1,128)}', space=vmem, size = 0x9000, scoped, tag = 'internal scratch']
  %s0 = inlined_call_operand.hbm [shape: bf16[8,128], index: 0, kind: input, shape index: {}]
  %s1 = inlined_call_operand.hbm [shape: bf16[128,128], index: 1, kind: input, shape index: {}]
  %s2 = inlined_call_operand.vmem [shape: f32[1,128], index: 2, kind: input, shape index: {}]
  %s3 = inlined_call_operand.hbm [shape: f32[8,128], index: 3, kind: output, shape index: {}]
  %s4 = sld [smem:[#allocation0]]
  $region30: #{tpu_custom_call.1} parent=0
    _
  %s6 = ssub.s32 1, %s4
  %s7 = scalar_select 0, %s6, %s4
  $region1: #{tpu_custom_call.1} parent=0
    #allocation2 [shape = 'u8[2048]{0}', space=vmem, size = 0x800, scoped, tag = 'input window, operand 0, single buffered']
    #allocation3 [shape = 's32[1]{0}', space=sflag, size = 0x4, scoped, tag = 'scoped memory for tpu_custom_call.1']
    #allocation4 [shape = 's32[1]{0}', space=sflag, size = 0x4, scoped, tag = 'scoped memory for tpu_custom_call.1']
    #allocation5 [shape = 'u8[32768]{0}', space=vmem, size = 0x8000, scoped, tag = 'input window, operand 1, single buffered']
    #allocation6 [shape = 's32[1]{0}', space=sflag, size = 0x4, scoped, tag = 'scoped memory for tpu_custom_call.1']
    #allocation7 [shape = 'u8[4096]{0}', space=vmem, size = 0x1000, scoped, tag = 'output window, operand 0, single buffered']
    %8 = vsyncpa [#allocation3], 0
    %9 = vsyncpa [#allocation6], 0
    %10 = vsyncpa [#allocation4], 0
    // Predicated region
    $region2: #{tpu_custom_call.1} parent=1 // pred_check
      _
    $region3: #{tpu_custom_call.1} parent=1 // pred_check_branch
      %12 = sbr.rel (0) target = $region5
    $region4: #{tpu_custom_call.1} parent=1 // pred_region
      %14 = vsyncadd [#allocation3], 0
      %s16 = sshll.u32 %s0, 4
      %s17 = int_to_ptr.hbm [resolvable:$true] %s16
      %s18 = sshll.u32 [#allocation2], 4
      %s19 = int_to_ptr.vmem [resolvable:$true] %s18
      %21 = dma.hbm_to_vmem [thread:$0]  %s17, 64, %s19, [#allocation3]
    $region5: #{tpu_custom_call.1} parent=1 // pred_fallthru
      _
    // Predicated region
    $region6: #{tpu_custom_call.1} parent=1 // pred_check
      _
    $region7: #{tpu_custom_call.1} parent=1 // pred_check_branch
      %23 = sbr.rel (0) target = $region9
    $region8: #{tpu_custom_call.1} parent=1 // pred_region
      %25 = vsyncadd [#allocation6], 0
      %s26 = sshll.u32 %s1, 4
      %s27 = int_to_ptr.hbm [resolvable:$true] %s26
      %s28 = sshll.u32 [#allocation5], 4
      %s29 = int_to_ptr.vmem [resolvable:$true] %s28
      %34 = dma.hbm_to_vmem [thread:$0]  %s27, 1024, %s29, [#allocation6], 64, 64, 4
    $region9: #{tpu_custom_call.1} parent=1 // pred_fallthru
      _
    // Predicated region
    $region10: #{tpu_custom_call.1} parent=1 // pred_check
      _
    $region11: #{tpu_custom_call.1} parent=1 // pred_check_branch
      %36 = sbr.rel (0) target = $region13
    $region12: #{tpu_custom_call.1} parent=1 // pred_region
      _
    $region13: #{tpu_custom_call.1} parent=1 // pred_fallthru
      _
    // Predicated region
    $region14: #{tpu_custom_call.1} parent=1 // pred_check
      _
    $region15: #{tpu_custom_call.1} parent=1 // pred_check_branch
      %38 = sbr.rel (0) target = $region17
    $region16: #{tpu_custom_call.1} parent=1 // pred_region
      %40 = dma.done [#allocation3], 64
    $region17: #{tpu_custom_call.1} parent=1 // pred_fallthru
      _
    // Predicated region
    $region18: #{tpu_custom_call.1} parent=1 // pred_check
      _
    $region19: #{tpu_custom_call.1} parent=1 // pred_check_branch
      %42 = sbr.rel (0) target = $region21
    $region20: #{tpu_custom_call.1} parent=1 // pred_region
      %44 = dma.done [#allocation6], 1024
    $region21: #{tpu_custom_call.1} parent=1 // pred_fallthru
      _
    %v45 = vld [vmem:[#allocation2] sm:$0xf]
    %v46 = vld [vmem:[#allocation5] sm:$0xf]
    %v47 = vld [vmem:[#allocation5 + $0x4] sm:$0xf]
    %v48 = vld [vmem:[#allocation5 + $0x8] sm:$0xf]
    %v49 = vld [vmem:[#allocation5 + $0xc] sm:$0xf]
    %v50 = vld [vmem:[#allocation5 + $0x10] sm:$0xf]
    %v51 = vld [vmem:[#allocation5 + $0x14] sm:$0xf]
    %v52 = vld [vmem:[#allocation5 + $0x18] sm:$0xf]
    %v53 = vld [vmem:[#allocation5 + $0x1c] sm:$0xf]
    %v54 = vld [vmem:[#allocation5 + $0x20] sm:$0xf]
    %v55 = vld [vmem:[#allocation5 + $0x24] sm:$0xf]
    %v56 = vld [vmem:[#allocation5 + $0x28] sm:$0xf]
    %v57 = vld [vmem:[#allocation5 + $0x2c] sm:$0xf]
    %v58 = vld [vmem:[#allocation5 + $0x30] sm:$0xf]
    %v59 = vld [vmem:[#allocation5 + $0x34] sm:$0xf]
    %v60 = vld [vmem:[#allocation5 + $0x38] sm:$0xf]
    %v61 = vld [vmem:[#allocation5 + $0x3c] sm:$0xf]
    %v62 = vld [vmem:[%s2] sm:$0x1]
    %v64 = vperm.slane %v62, 0
    %v82 = vunpack.c.l.b16 %v46
    %v83 = vunpack.c.l.b16 %v47
    %v84 = vunpack.c.l.b16 %v48
    %v85 = vunpack.c.l.b16 %v49
    %v86 = vunpack.c.l.b16 %v50
    %v87 = vunpack.c.l.b16 %v51
    %v88 = vunpack.c.l.b16 %v52
    %v89 = vunpack.c.l.b16 %v53
    %v90 = vunpack.c.l.b16 %v54
    %v91 = vunpack.c.l.b16 %v55
    %v92 = vunpack.c.l.b16 %v56
    %v93 = vunpack.c.l.b16 %v57
    %v94 = vunpack.c.l.b16 %v58
    %v95 = vunpack.c.l.b16 %v59
    %v96 = vunpack.c.l.b16 %v60
    %v97 = vunpack.c.l.b16 %v61
    %v98 = vpack.c.b16 %v83, %v82
    %v99 = vpack.c.b16 %v85, %v84
    %v100 = vpack.c.b16 %v87, %v86
    %v101 = vpack.c.b16 %v89, %v88
    %v102 = vpack.c.b16 %v91, %v90
    %v103 = vpack.c.b16 %v93, %v92
    %v104 = vpack.c.b16 %v95, %v94
    %v105 = vpack.c.b16 %v97, %v96
    %114 = vmatpush.bf16.msra.mxu0 %v105
    %115 = vmatpush.bf16.msra.mxu0 %v104
    %116 = vmatpush.bf16.msra.mxu0 %v103
    %117 = vmatpush.bf16.msra.mxu0 %v102
    %118 = vmatpush.bf16.msra.mxu0 %v101
    %119 = vmatpush.bf16.msra.mxu0 %v100
    %120 = vmatpush.bf16.msra.mxu0 %v99
    %121 = vmatpush.bf16.msra.mxu0 %v98
    %122 = vmatmul.bf16.gmra.mxu0 %v45
    %v123 = vpop.f32.mrf.mxu0
    %v124 = vadd.f32 %v64, %v123
    %v125 = vpop.f32.mrf.mxu0
    %126 = vdwg.mxu0
    %v127 = vmax.f32 %v124, 0.0
    %128 = vst [vmem:[#allocation7] sm:$0xff] %v127
    // Predicated region
    $region22: #{tpu_custom_call.1} parent=1 // pred_check
      _
    $region23: #{tpu_custom_call.1} parent=1 // pred_check_branch
      %130 = sbr.rel (0) target = $region25
    $region24: #{tpu_custom_call.1} parent=1 // pred_region
      %132 = vsyncadd [#allocation4], 0
      %s134 = sshll.u32 [#allocation7], 4
      %s135 = int_to_ptr.vmem [resolvable:$true] %s134
      %s136 = sshll.u32 %s3, 4
      %s137 = int_to_ptr.hbm [resolvable:$true] %s136
      %139 = dma.vmem_to_hbm [thread:$0]  %s135, 128, %s137, [#allocation4]
    $region25: #{tpu_custom_call.1} parent=1 // pred_fallthru
      _
    // Predicated region
    $region26: #{tpu_custom_call.1} parent=1 // pred_check
      _
    $region27: #{tpu_custom_call.1} parent=1 // pred_check_branch
      %141 = sbr.rel (0) target = $region29
    $region28: #{tpu_custom_call.1} parent=1 // pred_region
      %143 = dma.done [#allocation4], 128
    $region29: #{tpu_custom_call.1} parent=1 // pred_fallthru
      _
    %144 = vsyncpa [#allocation3], 1
    %145 = vsyncpa [#allocation6], 1
    %146 = vsyncpa [#allocation4], 1

</llo_original>
